<compile_context>
chip_gen: v5e
topology: v5e:2x2
jax: 0.10.0
libtpu: 0.0.40
codegen_flags: <defaults>
</compile_context>

<pallas_src>
import functools

import jax
import jax.numpy as jnp
from jax import lax
from jax.experimental import pallas as pl
from jax.experimental.pallas import tpu as pltpu


_LANES = 128


def _ntxent_cosine_kernel(q_ref, k_ref, out_ref, l_ref, *, shift):
    """Fixed-shift sum-of-exp over k tiles for one q tile (cosine path).

    q_ref:   (tq, D)    unit-norm reps, pre-scaled by 1/T
    k_ref:   (D, tk)    unit-norm reps, transposed
    out_ref: (1, 1, tq) per-row sum_j exp(s_ij - shift) over ALL pad_k columns
                        (self and padded columns included; wrapper corrects)
    l_ref:   (tq, 128)  per-lane partial sums (f32 scratch)
    """
    ki = pl.program_id(1)

    @pl.when(ki == 0)
    def _init():
        l_ref[...] = jnp.zeros_like(l_ref)

    # Plain (tq, D) x (D, tk) MXU contraction, f32 accumulation.
    s = jnp.dot(q_ref[...], k_ref[...], preferred_element_type=jnp.float32)
    e = jnp.exp(s - shift)                       # sim <= 1  =>  s <= shift

    # Fold the tk columns into 128 lanes with pure VPU adds (no XLU reduce
    # in the hot loop); static lane-aligned slices select vreg columns.
    acc = l_ref[...]
    tk = e.shape[1]
    for c in range(tk // _LANES):
        acc = acc + e[:, c * _LANES:(c + 1) * _LANES]
    l_ref[...] = acc

    @pl.when(ki == pl.num_programs(1) - 1)
    def _finalize():
        out_ref[0, 0, :] = jnp.sum(l_ref[...], axis=-1)


def _ntxent_dot_kernel(q_ref, k_ref, out_ref, m_ref, l_ref, *,
                       n_valid, mask_padded_cols):
    """Online masked logsumexp for the (unbounded) dot-similarity path.

    q_ref:   (tq, D)    reps, pre-scaled by 1/T
    k_ref:   (D, tk)    reps, transposed
    out_ref: (1, 1, tq) per-row logsumexp over valid j != i
    m_ref, l_ref: (tq, 1) f32 running max / running sum scratch
    """
    qi = pl.program_id(0)
    ki = pl.program_id(1)
    tq = q_ref.shape[0]
    tk = k_ref.shape[1]

    @pl.when(ki == 0)
    def _init():
        m_ref[...] = jnp.full_like(m_ref, -jnp.inf)
        l_ref[...] = jnp.zeros_like(l_ref)

    s = jnp.dot(q_ref[...], k_ref[...], preferred_element_type=jnp.float32)

    # Mask self-similarity (global diagonal); padded k columns only when
    # padding actually exists (static flag).
    row = lax.broadcasted_iota(jnp.int32, (tq, tk), 0) + qi * tq
    col = lax.broadcasted_iota(jnp.int32, (tq, tk), 1) + ki * tk
    mask = row == col
    if mask_padded_cols:
        mask = jnp.logical_or(mask, col >= n_valid)
    s = jnp.where(mask, jnp.float32(-1e30), s)

    m_prev = m_ref[...]                                              # (tq, 1)
    m_cur = jnp.maximum(m_prev, jnp.max(s, axis=-1, keepdims=True))  # (tq, 1)
    alpha = jnp.exp(m_prev - m_cur)
    l_ref[...] = alpha * l_ref[...] + jnp.sum(jnp.exp(s - m_cur),
                                              axis=-1, keepdims=True)
    m_ref[...] = m_cur

    @pl.when(ki == pl.num_programs(1) - 1)
    def _finalize():
        out_ref[0, 0, :] = m_ref[:, 0] + jnp.log(l_ref[:, 0])


def _round_up(x, m):
    return ((x + m - 1) // m) * m


def _pad_rows(x, rows):
    if rows == x.shape[0]:
        return x
    return jnp.pad(x, ((0, rows - x.shape[0]), (0, 0)))


def _vmem_limit_bytes():
    try:
        cap = int(pltpu.get_tpu_info().vmem_capacity_bytes)
    except Exception:
        cap = 64 * 1024 * 1024
    # <= ~48 MiB on v7x (64 MiB VMEM per TC); up to 96 MiB on v5e / v6e.
    return max(32 * 1024 * 1024, min(96 * 1024 * 1024, (cap * 3) // 4))


def ntxent_loss(zis, zjs, *, batch_size, temperature,
                use_cosine_similarity=True, matmul_dtype=jnp.bfloat16,
                q_tile=512, k_tile=1024):
    """zis, zjs: (batch, dim) float arrays. Returns a scalar f32 loss."""
    rep = jnp.concatenate([zjs, zis], axis=0).astype(jnp.float32)   # (2N, D)
    n2, d = rep.shape
    assert n2 == 2 * batch_size, "inputs must each have `batch_size` rows"

    if use_cosine_similarity:
        # torch.nn.CosineSimilarity: x / max(|x|, 1e-8) per row.
        sumsq = jnp.sum(rep * rep, axis=-1, keepdims=True)
        rep_n = rep * lax.rsqrt(jnp.maximum(sumsq, jnp.float32(1e-16)))
    else:
        rep_n = rep

    inv_t = float(1.0 / float(temperature))

    # q on sublanes (multiple of 8, clamped so nq >= 2 -> both v7x TCs get
    # work); k on lanes (multiple of 128).
    half_rows = _round_up((n2 + 1) // 2, 8)
    tq = max(8, min(_round_up(int(q_tile), 8), half_rows))
    tk = max(_LANES, min(_round_up(int(k_tile), _LANES), _round_up(n2, _LANES)))
    nq = pl.cdiv(n2, tq)
    nk = pl.cdiv(n2, tk)
    pad_q = nq * tq
    pad_k = nk * tk

    # 1/T folded into the q operand; k transposed once in the wrapper so the
    # kernel contraction is a plain (tq, D) x (D, tk) MXU matmul.
    q_side = _pad_rows(rep_n * inv_t, pad_q).astype(matmul_dtype)   # (pad_q, D)
    k_rows = _pad_rows(rep_n, pad_k).astype(matmul_dtype)           # (pad_k, D)
    k_side = k_rows.T                                               # (D, pad_k)

    # Positives sim[i, (i+N) mod 2N] / T, computed outside the kernel
    # (roll by +N == roll by -N modulo 2N).
    pos = inv_t * jnp.sum(rep_n * jnp.roll(rep_n, batch_size, axis=0), axis=-1)

    if use_cosine_similarity:
        kernel = functools.partial(_ntxent_cosine_kernel, shift=inv_t)
        scratch = [pltpu.VMEM((tq, _LANES), jnp.float32)]
    else:
        kernel = functools.partial(_ntxent_dot_kernel, n_valid=n2,
                                   mask_padded_cols=(pad_k != n2))
        scratch = [pltpu.VMEM((tq, 1), jnp.float32),    # running max
                   pltpu.VMEM((tq, 1), jnp.float32)]    # running sum

    out = pl.pallas_call(
        kernel,
        out_shape=jax.ShapeDtypeStruct((nq, 1, tq), jnp.float32),
        grid=(nq, nk),
        in_specs=[
            pl.BlockSpec((tq, d), lambda qi, ki: (qi, 0)),   # q tile (scaled)
            pl.BlockSpec((d, tk), lambda qi, ki: (0, ki)),   # k tile (D, tk)
        ],
        out_specs=pl.BlockSpec((1, 1, tq), lambda qi, ki: (qi, 0, 0)),
        scratch_shapes=scratch,
        compiler_params=pltpu.CompilerParams(
            dimension_semantics=("parallel", "arbitrary"),
            vmem_limit_bytes=_vmem_limit_bytes(),
        ),
    )(q_side, k_side)

    per_row = out.reshape(-1)[:n2]               # drop padded q rows

    if use_cosine_similarity:
        # per_row = sum_j exp(s_ij - 1/T) over ALL pad_k columns.  Remove the
        # self term (computed from the same cast operands the kernel saw) and
        # the (pad_k - n2) zero-padded columns (each contributes exp(-1/T)),
        # then finish the fixed-shift logsumexp.
        q_f = q_side[:n2].astype(jnp.float32)
        k_f = k_rows[:n2].astype(jnp.float32)
        diag = jnp.sum(q_f * k_f, axis=-1)                       # ~= 1/T
        pad_term = jnp.float32(pad_k - n2) * jnp.exp(jnp.float32(-inv_t))
        l_valid = per_row - jnp.exp(diag - inv_t) - pad_term
        lse = inv_t + jnp.log(l_valid)
    else:
        lse = per_row                                            # already lse

    return jnp.sum(lse - pos) / jnp.float32(n2)


def _ntxent_reference(zis, zjs, *, batch_size, temperature,
                      use_cosine_similarity=True):
    """Pure-JAX reference mirroring the PyTorch forward.

    CE(label=0, 'sum')/2N over logits=[pos, negatives]/T equals
    sum_i (logsumexp_{j != i} sim[i,j]/T - sim[i,(i+N)%2N]/T) / 2N, since the
    masked-out entries per row are exactly {i, (i+N)%2N} and the positive is
    re-inserted as column 0.
    """
    rep = jnp.concatenate([zjs, zis], axis=0).astype(jnp.float32)
    n2 = 2 * batch_size
    if use_cosine_similarity:
        norm = jnp.sqrt(jnp.sum(rep * rep, axis=-1, keepdims=True))
        rep_n = rep / jnp.maximum(norm, 1e-8)
    else:
        rep_n = rep
    sim = jnp.dot(rep_n, rep_n.T, precision=lax.Precision.HIGHEST) / temperature
    pos = jnp.diagonal(jnp.roll(sim, -batch_size, axis=1))   # sim[i,(i+N)%2N]
    logits = jnp.where(jnp.eye(n2, dtype=bool), -jnp.inf, sim)
    lse = jax.scipy.special.logsumexp(logits, axis=-1)
    return jnp.sum(lse - pos) / n2


if __name__ == "__main__":
    key = jax.random.PRNGKey(0)
    ks = jax.random.split(key, 10)
    dim, temperature = 32, 0.5
    tol = dict(rtol=2e-2, atol=2e-2)

    # (A) default cosine path: bf16 MXU operands, f32 accumulation / exp.
    b = 8
    zis = jax.random.normal(ks[0], (b, dim), jnp.float32)
    zjs = jax.random.normal(ks[1], (b, dim), jnp.float32)
    got = jax.block_until_ready(
        ntxent_loss(zis, zjs, batch_size=b, temperature=temperature))
    ref = _ntxent_reference(zis, zjs, batch_size=b, temperature=temperature)
    assert jnp.allclose(got, ref, **tol), ("A", got, ref)

    # (B) cosine path, f32 operands, multi-tile grid with q- and k-padding.
    b = 80
    zis = jax.random.normal(ks[2], (b, dim), jnp.float32)
    zjs = jax.random.normal(ks[3], (b, dim), jnp.float32)
    got = jax.block_until_ready(
        ntxent_loss(zis, zjs, batch_size=b, temperature=temperature,
                    matmul_dtype=jnp.float32, q_tile=64, k_tile=128))
    ref = _ntxent_reference(zis, zjs, batch_size=b, temperature=temperature)
    assert jnp.allclose(got, ref, **tol), ("B", got, ref)

    # (C) cosine path, odd batch requiring both q- and k-padding.
    b = 5
    zis = jax.random.normal(ks[4], (b, dim), jnp.float32)
    zjs = jax.random.normal(ks[5], (b, dim), jnp.float32)
    got = jax.block_until_ready(
        ntxent_loss(zis, zjs, batch_size=b, temperature=temperature,
                    matmul_dtype=jnp.float32))
    ref = _ntxent_reference(zis, zjs, batch_size=b, temperature=temperature)
    assert jnp.allclose(got, ref, **tol), ("C", got, ref)

    # (D) dot-product similarity branch (online-max kernel).
    b = 8
    zis = 0.5 * jax.random.normal(ks[6], (b, dim), jnp.float32)
    zjs = 0.5 * jax.random.normal(ks[7], (b, dim), jnp.float32)
    got = jax.block_until_ready(
        ntxent_loss(zis, zjs, batch_size=b, temperature=temperature,
                    use_cosine_similarity=False, matmul_dtype=jnp.float32))
    ref = _ntxent_reference(zis, zjs, batch_size=b, temperature=temperature,
                            use_cosine_similarity=False)
    assert jnp.allclose(got, ref, **tol), ("D", got, ref)

    # (E) dot-product branch, multi-tile grid with padded-column masking.
    b = 80
    zis = 0.5 * jax.random.normal(ks[8], (b, dim), jnp.float32)
    zjs = 0.5 * jax.random.normal(ks[9], (b, dim), jnp.float32)
    got = jax.block_until_ready(
        ntxent_loss(zis, zjs, batch_size=b, temperature=temperature,
                    use_cosine_similarity=False, matmul_dtype=jnp.float32,
                    q_tile=64, k_tile=128))
    ref = _ntxent_reference(zis, zjs, batch_size=b, temperature=temperature,
                            use_cosine_similarity=False)
    assert jnp.allclose(got, ref, **tol), ("E", got, ref)

    print("KERNEL_OK")
</pallas_src>

<mosaic_0001>
module attributes {stable_mosaic.version = 11 : i64} {
  func.func @_ntxent_cosine_kernel(%arg0: i32, %arg1: i32, %arg2: memref<8x32xbf16, #tpu.memory_space<vmem>>, %arg3: memref<32x128xbf16, #tpu.memory_space<vmem>>, %arg4: memref<1x1x8xf32, #tpu.memory_space<vmem>>, %arg5: memref<8x128xf32, #tpu.memory_space<vmem>>) attributes {dimension_semantics = [#tpu.dimension_semantics<parallel>, #tpu.dimension_semantics<arbitrary>], iteration_bounds = array<i64: 2, 1>, scalar_prefetch = 0 : i64, scratch_operands = 1 : i64, tpu.core_type = #tpu.core_type<tc>, window_params = [{transform_indices = @transform_0, window_bounds = array<i64: 8, 32>}, {transform_indices = @transform_1, window_bounds = array<i64: 32, 128>}, {transform_indices = @transform_2, window_bounds = array<i64: 1, 1, 8>}]} {
    %c0_i32 = arith.constant 0 : i32
    %0 = arith.cmpi eq, %arg1, %c0_i32 : i32
    %1 = arith.extui %0 : i1 to i32
    %c0_i32_0 = arith.constant 0 : i32
    %2 = arith.cmpi ne, %1, %c0_i32_0 : i32
    scf.if %2 {
      %cst_11 = arith.constant 0.000000e+00 : f32
      %15 = vector.broadcast %cst_11 : f32 to vector<8x128xf32>
      %c0_12 = arith.constant 0 : index
      %c0_13 = arith.constant 0 : index
      %16 = vector.load %arg5[%c0_12, %c0_13] : memref<8x128xf32, #tpu.memory_space<vmem>>, vector<8x128xf32>
      tpu.vector_store %arg5[%c0_12, %c0_13], %15 {strides = array<i32>} : memref<8x128xf32, #tpu.memory_space<vmem>>, vector<8x128xf32>,
    } else {
    }
    %c0 = arith.constant 0 : index
    %c0_1 = arith.constant 0 : index
    %3 = vector.load %arg2[%c0, %c0_1] : memref<8x32xbf16, #tpu.memory_space<vmem>>, vector<8x32xbf16>
    %c0_2 = arith.constant 0 : index
    %c0_3 = arith.constant 0 : index
    %4 = vector.load %arg3[%c0_2, %c0_3] : memref<32x128xbf16, #tpu.memory_space<vmem>>, vector<32x128xbf16>
    %cst = arith.constant dense<0.000000e+00> : vector<8x128xf32>
    %5 = tpu.matmul %3, %4, %cst {dimension_numbers = #tpu.dot_dimension_numbers<[1], [0], [0], [1], [0, 0, 1, 1], [], []>} : vector<8x32xbf16>, vector<32x128xbf16>, vector<8x128xf32> -> vector<8x128xf32>
    %cst_4 = arith.constant 2.000000e+00 : f32
    %6 = vector.broadcast %cst_4 : f32 to vector<8x128xf32>
    %7 = arith.subf %5, %6 : vector<8x128xf32>
    %8 = math.exp %7 : vector<8x128xf32>
    %c0_5 = arith.constant 0 : index
    %c0_6 = arith.constant 0 : index
    %9 = vector.load %arg5[%c0_5, %c0_6] : memref<8x128xf32, #tpu.memory_space<vmem>>, vector<8x128xf32>
    %10 = arith.addf %9, %8 : vector<8x128xf32>
    %c0_7 = arith.constant 0 : index
    %c0_8 = arith.constant 0 : index
    %11 = vector.load %arg5[%c0_7, %c0_8] : memref<8x128xf32, #tpu.memory_space<vmem>>, vector<8x128xf32>
    tpu.vector_store %arg5[%c0_7, %c0_8], %10 {strides = array<i32>} : memref<8x128xf32, #tpu.memory_space<vmem>>, vector<8x128xf32>,
    %c0_i32_9 = arith.constant 0 : i32
    %12 = arith.cmpi eq, %arg1, %c0_i32_9 : i32
    %13 = arith.extui %12 : i1 to i32
    %c0_i32_10 = arith.constant 0 : i32
    %14 = arith.cmpi ne, %13, %c0_i32_10 : i32
    scf.if %14 {
      %c0_11 = arith.constant 0 : index
      %c0_12 = arith.constant 0 : index
      %15 = vector.load %arg5[%c0_11, %c0_12] : memref<8x128xf32, #tpu.memory_space<vmem>>, vector<8x128xf32>
      %cst_13 = arith.constant dense<0.000000e+00> : vector<8xf32>
      %16 = vector.multi_reduction <add>, %15, %cst_13 [1] : vector<8x128xf32> to vector<8xf32>
      %c0_14 = arith.constant 0 : index
      %c0_15 = arith.constant 0 : index
      %c0_16 = arith.constant 0 : index
      %17 = vector.load %arg4[%c0_14, %c0_15, %c0_16] : memref<1x1x8xf32, #tpu.memory_space<vmem>>, vector<1x1x8xf32>
      %18 = vector.shape_cast %17 : vector<1x1x8xf32> to vector<8xf32>
      %19 = vector.shape_cast %16 : vector<8xf32> to vector<1x1x8xf32>
      tpu.vector_store %arg4[%c0_14, %c0_15, %c0_16], %19 {strides = array<i32>} : memref<1x1x8xf32, #tpu.memory_space<vmem>>, vector<1x1x8xf32>,
    } else {
    }
    return
  }
  func.func @transform_0(%arg0: i32, %arg1: i32) -> (i32, i32) {
    %c0_i32 = arith.constant 0 : i32
    %c0_i32_0 = arith.constant 0 : i32
    return %arg0, %c0_i32 : i32, i32
  }
  func.func @transform_1(%arg0: i32, %arg1: i32) -> (i32, i32) {
    %c0_i32 = arith.constant 0 : i32
    %c0_i32_0 = arith.constant 0 : i32
    return %c0_i32, %arg1 : i32, i32
  }
  func.func @transform_2(%arg0: i32, %arg1: i32) -> (i32, i32, i32) {
    %c0_i32 = arith.constant 0 : i32
    %c0_i32_0 = arith.constant 0 : i32
    %c0_i32_1 = arith.constant 0 : i32
    return %arg0, %c0_i32, %c0_i32_0 : i32, i32, i32
  }
}

</mosaic_0001>

<llo_original>
// kernel: tpu_custom_call.1
$region0: #{tpu_custom_call.1}
  #allocation0 [shape = 'u32[]', space=smem, size = 0x4, offset = 0x4, fixed_abs, tag = 'smem constant byte address 0x4 - core index']
  #allocation1 [shape = 'u32[72,128]{1,0:T(1,128)}', space=vmem, size = 0x9000, scoped, tag = 'internal scratch']
  #allocation2 [shape = 'f32[8,128]{1,0:T(8,128)}', space=vmem, size = 0x1000, scoped, tag = 'scratch operand']
  %s0 = inlined_call_operand.hbm [shape: bf16[16,32], index: 0, kind: input, shape index: {}]
  %s1 = inlined_call_operand.hbm [shape: bf16[32,128], index: 1, kind: input, shape index: {}]
  %s2 = inlined_call_operand.hbm [shape: f32[2,1,8], index: 2, kind: output, shape index: {}]
  %s3 = sld [smem:[#allocation0]]
  $region57: #{tpu_custom_call.1} parent=0
    _
  %s5 = ssub.s32 1, %s3
  %s6 = scalar_select 0, %s5, %s3
  $region1: #{tpu_custom_call.1} parent=0
    #allocation3 [shape = 'u8[4096]{0}', space=vmem, size = 0x1000, scoped, tag = 'input window, operand 0']
    #allocation4 [shape = 's32[2]{0}', space=sflag, size = 0x8, scoped, tag = 'scoped memory for tpu_custom_call.1']
    #allocation5 [shape = 's32[2]{0}', space=sflag, size = 0x8, scoped, tag = 'scoped memory for tpu_custom_call.1']
    #allocation6 [shape = 'u8[8192]{0}', space=vmem, size = 0x2000, scoped, tag = 'input window, operand 1, single buffered']
    #allocation7 [shape = 's32[1]{0}', space=sflag, size = 0x4, scoped, tag = 'scoped memory for tpu_custom_call.1']
    #allocation8 [shape = 'u8[1024]{0}', space=vmem, size = 0x400, scoped, tag = 'output window, operand 0']
    %7 = vsyncpa [#allocation4], 0
    %s8 = scalar_lea.sflag [#allocation4], 1
    %9 = vsyncpa %s8, 0
    %10 = vsyncpa [#allocation7], 0
    %11 = vsyncpa [#allocation5], 0
    %s12 = scalar_lea.sflag [#allocation5], 1
    %13 = vsyncpa %s12, 0
    loop: start=0, step=1, limit=4
    $region2: #{tpu_custom_call.1} parent=1 // loop_pre_header
      _
    $region3: #{tpu_custom_call.1} parent=1 // loop_header
      %s15 = sphi 0, %s19
      %p16 = scmp.ge.s32.totalorder %s15, 4
      %s22 = sphi 0, %s34
      %s23 = sphi 0, %s30
      %s24 = sphi 0, %s22
      %s25 = sphi 0, %s23
      %s26 = sphi 0, %s24
      %s27 = sphi 0, %s25
      %s37 = sphi 0, %s39
      %s40 = sphi 0, %s37
      %s41 = sphi 0, %s40
      %s57 = sphi 0, %s41
      %s63 = sphi 0, %s65
      %s66 = sphi 0, %s63
      %s67 = sphi 0, %s66
      %s83 = sphi 0, %s67
      %s89 = sphi 0, %s91
      %s92 = sphi 0, %s89
      %s93 = sphi 0, %s92
      %s109 = sphi 0, %s93
    $region4: #{tpu_custom_call.1} parent=1 // loop_header_branch
      %18 = sbr.rel (%p16) target = $region8
    $region5: #{tpu_custom_call.1} parent=1 // loop_body
      %s20 = ssub.s32 %s15, 1
      %s21 = ssub.s32 %s15, 2
      %s28 = sadd.s32 1, %s23
      %p29 = scmp.ge.s32.totalorder %s28, 1
      %s30 = scalar_select %p29, 0, %s28
      %s31 = sadd.s32 1, %s22
      %s32 = scalar_select %p29, %s31, %s22
      %p33 = scmp.ge.s32.totalorder %s32, 2
      %s34 = scalar_select %p33, 0, %s32
      %s35 = ssub.s32 %s22, %s34
      %p36 = scmp.eq.s32.totalorder %s35, 0
      %s38 = sadd.s32 %s37, 1
      %s39 = scalar_select %p36, %s37, %s38
      %p42 = pneg %p36
      %p43 = scmp.eq.s32.totalorder %s15, 1
      %p44 = por %p42, %p43
      %p45 = scmp.ne.s32.totalorder %s37, %s40
      %p46 = scmp.eq.s32.totalorder %s15, 0
      %p47 = por %p45, %p46
      %p48 = scmp.ne.s32.totalorder %s37, %s40
      %p49 = scmp.eq.s32.totalorder %s20, 1
      %p50 = por %p48, %p49
      %p51 = scmp.ne.s32.totalorder %s40, %s41
      %p52 = scmp.eq.s32.totalorder %s20, 0
      %p53 = por %p51, %p52
      %p54 = scmp.ne.s32.totalorder %s40, %s41
      %p55 = scmp.eq.s32.totalorder %s21, 1
      %p56 = por %p54, %p55
      %p58 = scmp.ne.s32.totalorder %s41, %s57
      %p59 = scmp.eq.s32.totalorder %s21, 0
      %p60 = por %p58, %p59
      %s61 = ssub.s32 %s23, %s30
      %p62 = scmp.eq.s32.totalorder %s61, 0
      %s64 = sadd.s32 %s63, 1
      %s65 = scalar_select %p62, %s63, %s64
      %p68 = pneg %p62
      %p69 = scmp.eq.s32.totalorder %s15, 1
      %p70 = por %p68, %p69
      %p71 = scmp.ne.s32.totalorder %s63, %s66
      %p72 = scmp.eq.s32.totalorder %s15, 0
      %p73 = por %p71, %p72
      %p74 = scmp.ne.s32.totalorder %s63, %s66
      %p75 = scmp.eq.s32.totalorder %s20, 1
      %p76 = por %p74, %p75
      %p77 = scmp.ne.s32.totalorder %s66, %s67
      %p78 = scmp.eq.s32.totalorder %s20, 0
      %p79 = por %p77, %p78
      %p80 = scmp.ne.s32.totalorder %s66, %s67
      %p81 = scmp.eq.s32.totalorder %s21, 1
      %p82 = por %p80, %p81
      %p84 = scmp.ne.s32.totalorder %s67, %s83
      %p85 = scmp.eq.s32.totalorder %s21, 0
      %p86 = por %p84, %p85
      %s87 = ssub.s32 %s22, %s34
      %p88 = scmp.eq.s32.totalorder %s87, 0
      %s90 = sadd.s32 %s89, 1
      %s91 = scalar_select %p88, %s89, %s90
      %p94 = pneg %p88
      %p95 = scmp.eq.s32.totalorder %s15, 1
      %p96 = por %p94, %p95
      %p97 = scmp.ne.s32.totalorder %s89, %s92
      %p98 = scmp.eq.s32.totalorder %s15, 0
      %p99 = por %p97, %p98
      %p100 = scmp.ne.s32.totalorder %s89, %s92
      %p101 = scmp.eq.s32.totalorder %s20, 1
      %p102 = por %p100, %p101
      %p103 = scmp.ne.s32.totalorder %s92, %s93
      %p104 = scmp.eq.s32.totalorder %s20, 0
      %p105 = por %p103, %p104
      %p106 = scmp.ne.s32.totalorder %s92, %s93
      %p107 = scmp.eq.s32.totalorder %s21, 1
      %p108 = por %p106, %p107
      %p110 = scmp.ne.s32.totalorder %s93, %s109
      %p111 = scmp.eq.s32.totalorder %s21, 0
      %p112 = por %p110, %p111
      %p113 = scmp.le.s32.totalorder 1, %s15
      %p114 = scmp.lt.s32.totalorder %s15, 3
      %p115 = pnand %p113, %p114
      %p116 = pneg %p115
      // Predicated region
      $region9: #{tpu_custom_call.1} parent=5 // pred_check
        _
      $region10: #{tpu_custom_call.1} parent=5 // pred_check_branch
        %118 = sbr.rel (%p115) target = $region12
      $region11: #{tpu_custom_call.1} parent=5 // pred_region
        %s119 = ssub.s32 %s15, 1
        // Predicated region
        $region13: #{tpu_custom_call.1} parent=11 // pred_check
          %p120 = pneg %p79
        $region14: #{tpu_custom_call.1} parent=11 // pred_check_branch
          %122 = sbr.rel (%p120) target = $region16
        $region15: #{tpu_custom_call.1} parent=11 // pred_region
          %124 = vsyncadd [#allocation7], 0
          %s125 = smul.addr %s25, 4
          %s126 = scalar_lea.hbm %s1, %s125
          %s127 = sshll.u32 %s126, 4
          %s128 = int_to_ptr.hbm [resolvable:$true] %s127
          %s129 = sshll.u32 [#allocation6], 4
          %s130 = int_to_ptr.vmem [resolvable:$true] %s129
          %135 = dma.hbm_to_vmem [thread:$0]  %s128, 256, %s130, [#allocation7], 64, 64, 4
        $region16: #{tpu_custom_call.1} parent=11 // pred_fallthru
          _
      $region12: #{tpu_custom_call.1} parent=5 // pred_fallthru
        _
      %p136 = scmp.lt.s32.totalorder %s15, 2
      // Predicated region
      $region17: #{tpu_custom_call.1} parent=5 // pred_check
        %p137 = pneg %p136
      $region18: #{tpu_custom_call.1} parent=5 // pred_check_branch
        %139 = sbr.rel (%p137) target = $region20
      $region19: #{tpu_custom_call.1} parent=5 // pred_region
        // Predicated region
        $region21: #{tpu_custom_call.1} parent=19 // pred_check
          %p140 = pneg %p47
        $region22: #{tpu_custom_call.1} parent=19 // pred_check_branch
          %142 = sbr.rel (%p140) target = $region24
        $region23: #{tpu_custom_call.1} parent=19 // pred_region
          %s143 = sand.u32 %s37, 1
          %s144 = scalar_lea.sflag [#allocation4], %s143
          %s145 = sand.u32 %s37, 1
          %s146 = smul.addr %s145, 4
          %s147 = scalar_lea.vmem [#allocation3], %s146
          %149 = vsyncadd %s144, 0
          %s150 = smul.addr %s22, 4
          %s151 = scalar_lea.hbm %s0, %s150
          %s153 = sshll.u32 %s151, 4
          %s154 = int_to_ptr.hbm [resolvable:$true] %s153
          %s155 = sshll.u32 %s147, 4
          %s156 = int_to_ptr.vmem [resolvable:$true] %s155
          %158 = dma.hbm_to_vmem [thread:$0]  %s154, 64, %s156, %s144
        $region24: #{tpu_custom_call.1} parent=19 // pred_fallthru
          _
      $region20: #{tpu_custom_call.1} parent=5 // pred_fallthru
        _
      %p159 = scmp.le.s32.totalorder 1, %s15
      %p160 = scmp.lt.s32.totalorder %s15, 3
      %p161 = pnand %p159, %p160
      %p162 = pneg %p161
      // Predicated region
      $region25: #{tpu_custom_call.1} parent=5 // pred_check
        _
      $region26: #{tpu_custom_call.1} parent=5 // pred_check_branch
        %164 = sbr.rel (%p161) target = $region28
      $region27: #{tpu_custom_call.1} parent=5 // pred_region
        %s165 = ssub.s32 %s15, 1
        %s166 = sand.u32 %s40, 1
        %s167 = scalar_lea.sflag [#allocation4], %s166
        %s168 = sand.u32 %s40, 1
        %s169 = smul.addr %s168, 4
        %s170 = scalar_lea.vmem [#allocation3], %s169
        // Predicated region
        $region29: #{tpu_custom_call.1} parent=27 // pred_check
          %p171 = pneg %p53
        $region30: #{tpu_custom_call.1} parent=27 // pred_check_branch
          %173 = sbr.rel (%p171) target = $region32
        $region31: #{tpu_custom_call.1} parent=27 // pred_region
          %175 = dma.done %s167, 64
        $region32: #{tpu_custom_call.1} parent=27 // pred_fallthru
          _
        // Predicated region
        $region33: #{tpu_custom_call.1} parent=27 // pred_check
          %p176 = pneg %p79
        $region34: #{tpu_custom_call.1} parent=27 // pred_check_branch
          %178 = sbr.rel (%p176) target = $region36
        $region35: #{tpu_custom_call.1} parent=27 // pred_region
          %180 = dma.done [#allocation7], 256
        $region36: #{tpu_custom_call.1} parent=27 // pred_fallthru
          _
        %s181 = sand.u32 %s40, 1
        %s182 = scalar_lea.sflag [#allocation4], %s181
        %s183 = sand.u32 %s40, 1
        %s184 = smul.addr %s183, 4
        %s185 = scalar_lea.vmem [#allocation3], %s184
        %p186 = pneg %p53
        %p187 = pneg %p50
        %p188 = pneg %p79
        %p189 = pneg %p76
        %p190 = pneg %p105
        %p191 = pneg %p102
        %s192 = sand.u32 %s92, 1
        %s193 = scalar_lea.sflag [#allocation5], %s192
        %s194 = sand.u32 %s92, 1
        %s195 = scalar_lea.vmem [#allocation8], %s194
        %p197 = scmp.eq.s32.totalorder %s25, 0
        // Predicated region
        $region37: #{tpu_custom_call.1} parent=27 // pred_check
          %p198 = pneg %p197
        $region38: #{tpu_custom_call.1} parent=27 // pred_check_branch
          %200 = sbr.rel (%p198) target = $region40
        $region39: #{tpu_custom_call.1} parent=27 // pred_region
          %201 = vst [vmem:[#allocation2] sm:$0xff] 0.0
        $region40: #{tpu_custom_call.1} parent=27 // pred_fallthru
          _
        %v202 = vld [vmem:[%s170] sm:$0xf]
        %v203 = vld [vmem:[#allocation6] sm:$0xf]
        %v204 = vld [vmem:[#allocation6 + $0x4] sm:$0xf]
        %v205 = vld [vmem:[#allocation6 + $0x8] sm:$0xf]
        %v206 = vld [vmem:[#allocation6 + $0xc] sm:$0xf]
        %v211 = vunpack.c.l.b16 %v203
        %v212 = vunpack.c.l.b16 %v204
        %v213 = vunpack.c.l.b16 %v205
        %v214 = vunpack.c.l.b16 %v206
        %v215 = vpack.c.b16 %v212, %v211
        %v216 = vpack.c.b16 %v214, %v213
        %vm219 = vcmask 261120
        %v221 = vsel %vm219, %v202, 0
        %223 = vmatpush.bf16.msra.mxu0 0
        %224 = vmatpush.bf16.msra.mxu0 0
        %225 = vmatpush.bf16.msra.mxu0 0
        %226 = vmatpush.bf16.msra.mxu0 0
        %227 = vmatpush.bf16.msra.mxu0 0
        %228 = vmatpush.bf16.msra.mxu0 0
        %229 = vmatpush.bf16.msra.mxu0 %v216
        %230 = vmatpush.bf16.msra.mxu0 %v215
        %231 = vmatmul.bf16.gmra.mxu0 %v221
        %v232 = vpop.f32.mrf.mxu0
        %v233 = vadd.f32 0.0, %v232
        %v234 = vpop.f32.mrf.mxu0
        %235 = vdwg.mxu0
        %v236 = vsub.f32 %v233, 2.0
        %v237 = vmul.f32 %v236, 1.442695
        %v238 = vpow.pop %v237
        %v239 = vld [vmem:[#allocation2] sm:$0xff]
        %v240 = vadd.f32 %v239, %v238
        %241 = vst [vmem:[#allocation2] sm:$0xff] %v240
        // Predicated region
        $region41: #{tpu_custom_call.1} parent=27 // pred_check
          %p242 = pneg %p197
        $region42: #{tpu_custom_call.1} parent=27 // pred_check_branch
          %244 = sbr.rel (%p242) target = $region44
        $region43: #{tpu_custom_call.1} parent=27 // pred_region
          %v245 = vld [vmem:[#allocation2] sm:$0xff]
          %246 = vadd.xlane.f32.xlu0 %v245
          %v247 = vpop.xlane.xlu0 %246
          %v249 = vlaneseq
          %v250 = vand.u32 %v249, 127
          %v251 = vperm.slane %v247, %v250
          %vm253 = vcmask 57344
          %254 = vst.msk [vmem:[%s195] sm:$0x1] %vm253, %v251
        $region44: #{tpu_custom_call.1} parent=27 // pred_fallthru
          _
        %s255 = sand.u32 %s92, 1
        %s256 = scalar_lea.sflag [#allocation5], %s255
        %s257 = sand.u32 %s92, 1
        %s258 = scalar_lea.vmem [#allocation8], %s257
        // Predicated region
        $region45: #{tpu_custom_call.1} parent=27 // pred_check
          %p259 = pneg %p102
        $region46: #{tpu_custom_call.1} parent=27 // pred_check_branch
          %261 = sbr.rel (%p259) target = $region48
        $region47: #{tpu_custom_call.1} parent=27 // pred_region
          %263 = vsyncadd %s256, 0
          %s264 = scalar_lea.hbm %s2, %s24
          %s266 = sshll.u32 %s258, 4
          %s267 = int_to_ptr.vmem [resolvable:$true] %s266
          %s268 = sshll.u32 %s264, 4
          %s269 = int_to_ptr.hbm [resolvable:$true] %s268
          %271 = dma.vmem_to_hbm [thread:$0]  %s267, 16, %s269, %s256
        $region48: #{tpu_custom_call.1} parent=27 // pred_fallthru
          _
      $region28: #{tpu_custom_call.1} parent=5 // pred_fallthru
        _
      %p272 = scmp.le.s32.totalorder 2, %s15
      // Predicated region
      $region49: #{tpu_custom_call.1} parent=5 // pred_check
        %p273 = pneg %p272
      $region50: #{tpu_custom_call.1} parent=5 // pred_check_branch
        %275 = sbr.rel (%p273) target = $region52
      $region51: #{tpu_custom_call.1} parent=5 // pred_region
        %s276 = ssub.s32 %s15, 2
        // Predicated region
        $region53: #{tpu_custom_call.1} parent=51 // pred_check
          %p277 = pneg %p108
        $region54: #{tpu_custom_call.1} parent=51 // pred_check_branch
          %279 = sbr.rel (%p277) target = $region56
        $region55: #{tpu_custom_call.1} parent=51 // pred_region
          %s280 = sand.u32 %s93, 1
          %s281 = scalar_lea.sflag [#allocation5], %s280
          %s282 = sand.u32 %s93, 1
          %s283 = scalar_lea.vmem [#allocation8], %s282
          %285 = dma.done %s281, 16
        $region56: #{tpu_custom_call.1} parent=51 // pred_fallthru
          _
      $region52: #{tpu_custom_call.1} parent=5 // pred_fallthru
        _
    $region6: #{tpu_custom_call.1} parent=1 // loop_footer
      %s19 = sadd.s32 1, %s15
    $region7: #{tpu_custom_call.1} parent=1 // loop_footer_branch
      %14 = sbr.rel target = $region3
    $region8: #{tpu_custom_call.1} parent=1 // loop_exit
      _
    %286 = vsyncpa [#allocation4], 1
    %s287 = scalar_lea.sflag [#allocation4], 1
    %288 = vsyncpa %s287, 1
    %289 = vsyncpa [#allocation7], 1
    %290 = vsyncpa [#allocation5], 1
    %s291 = scalar_lea.sflag [#allocation5], 1
    %292 = vsyncpa %s291, 1

</llo_original>
